<compile_context>
chip_gen: v5e
topology: v5e:2x2
jax: 0.10.0
libtpu: 0.0.40
codegen_flags: <defaults>
</compile_context>

<pallas_src>
import functools
import math

import jax
import jax.numpy as jnp
from jax import lax
from jax.experimental import pallas as pl
from jax.experimental.pallas import tpu as pltpu


_LANES = 128     # TPU vreg lane width
_SUBLANES = 8    # TPU vreg sublane count (f32)


def _i32(x):
    """Python int -> two's-complement int32 constant (for hash constants >= 2^31)."""
    x &= 0xFFFFFFFF
    if x >= (1 << 31):
        x -= (1 << 32)
    return jnp.int32(x)


def _attn_kernel(seed_ref, x_ref, kt_ref, v_ref, o_ref, *, scale, dropout_p, d_valid):
    # Everything lives in VMEM; one invocation, no grid loop.
    x = x_ref[...]           # (R, Dp)  f32, feature dim zero-padded to lane width
    kt = kt_ref[...]         # (Dp, Dp) f32 == key.T (transpose hoisted to wrapper), zero-padded
    v = v_ref[...]           # (Dp, Dp) f32 == value, zero-padded

    # qk = x1 @ key^T   (padded cols of x / padded rows of key^T are zero -> exact)
    qk = jnp.dot(x, kt, preferred_element_type=jnp.float32)          # (R, Dp)
    scaled = qk * scale                                               # module multiplies by sqrt(d_in)

    # Mask the zero-padded columns so they do not pollute the softmax.
    col = lax.broadcasted_iota(jnp.int32, scaled.shape, 1)
    valid = col < d_valid
    scaled = jnp.where(valid, scaled, jnp.float32(-1e30))

    # softmax over the last dim
    m = jnp.max(scaled, axis=-1, keepdims=True)
    e = jnp.exp(scaled - m)
    e = jnp.where(valid, e, 0.0)
    denom = jnp.sum(e, axis=-1, keepdims=True)
    p_attn = e / denom

    # Inverted dropout (training mode). Counter-based hash PRNG: fmix32(lin_index ^ f(seed))
    # -> uniform [0,1) -> keep mask. Pure jnp integer ops only (portable lowering).
    row = lax.broadcasted_iota(jnp.int32, scaled.shape, 0)
    lin = row * jnp.int32(scaled.shape[1]) + col
    seed = seed_ref[0]
    h = lin ^ (seed * _i32(0x9E3779B9))
    h = h ^ ((h >> 16) & jnp.int32(0x0000FFFF))      # logical >> 16 (arith shift + mask)
    h = h * _i32(0x85EBCA6B)
    h = h ^ ((h >> 13) & jnp.int32(0x0007FFFF))      # logical >> 13
    h = h * _i32(0xC2B2AE35)
    h = h ^ ((h >> 16) & jnp.int32(0x0000FFFF))      # logical >> 16
    u = (h & jnp.int32(0x00FFFFFF)).astype(jnp.float32) * jnp.float32(1.0 / (1 << 24))
    keep = u >= jnp.float32(dropout_p)
    dropped = jnp.where(keep, p_attn * (1.0 / (1.0 - dropout_p)), 0.0)

    # output = dropped @ value  (padded rows/cols of value are zero -> padded output cols are 0)
    out = jnp.dot(dropped, v, preferred_element_type=jnp.float32)
    o_ref[...] = out.astype(o_ref.dtype)


def sfdp_attention(x1, key_w, value_w, seed, *, dropout_p=0.1):
    """x1: (B, S, d_in) f32; key_w/value_w: (d_in, d_out) f32; seed: python int."""
    B, S, D_in = x1.shape
    ki, ko = key_w.shape
    assert ki == D_in and ko == D_in, "module semantics require d_in == d_out == x1 feature dim"
    D_out = ko
    scale = float(D_in) ** 0.5

    # Flatten batch*seq into rows (key/value are shared across batch; softmax is per-row)
    # and zero-pad to (sublane, lane) multiples so every vector op/store is lane-dense.
    R = B * S
    Rp = ((R + _SUBLANES - 1) // _SUBLANES) * _SUBLANES
    Dp = ((max(D_in, D_out) + _LANES - 1) // _LANES) * _LANES

    x_pad = jnp.zeros((Rp, Dp), jnp.float32).at[:R, :D_in].set(
        x1.reshape(R, D_in).astype(jnp.float32))
    kt_pad = jnp.zeros((Dp, Dp), jnp.float32).at[:D_out, :D_in].set(
        key_w.T.astype(jnp.float32))                       # key transpose hoisted out of kernel
    v_pad = jnp.zeros((Dp, Dp), jnp.float32).at[:D_in, :D_out].set(
        value_w.astype(jnp.float32))
    seed_arr = jnp.asarray([seed], dtype=jnp.int32)

    kernel = functools.partial(
        _attn_kernel, scale=scale, dropout_p=float(dropout_p), d_valid=D_in)

    out_pad = pl.pallas_call(
        kernel,
        out_shape=jax.ShapeDtypeStruct((Rp, Dp), jnp.float32),
        in_specs=[
            pl.BlockSpec(memory_space=pltpu.MemorySpace.SMEM),   # seed (1,) int32
            pl.BlockSpec(memory_space=pltpu.MemorySpace.VMEM),   # x     (Rp, Dp)
            pl.BlockSpec(memory_space=pltpu.MemorySpace.VMEM),   # key^T (Dp, Dp)
            pl.BlockSpec(memory_space=pltpu.MemorySpace.VMEM),   # value (Dp, Dp)
        ],
        out_specs=pl.BlockSpec(memory_space=pltpu.MemorySpace.VMEM),
    )(seed_arr, x_pad, kt_pad, v_pad)

    return out_pad[:R, :D_out].reshape(B, S, D_out).astype(x1.dtype)


if __name__ == "__main__":
    # Small shapes consistent with the module: batch=2, seq=8, hidden (d_in == d_out) = 32.
    B, S, D = 2, 8, 32
    d_in = d_out = D

    root = jax.random.PRNGKey(0)
    kx, kq, kk, kv = jax.random.split(root, 4)

    x1 = jax.random.normal(kx, (B, S, d_in), dtype=jnp.float32)
    query_w = jax.random.normal(kq, (d_in, d_out), dtype=jnp.float32) / math.sqrt(d_in)  # unused in forward (matches PyTorch)
    key_w = jax.random.normal(kk, (d_in, d_out), dtype=jnp.float32) / math.sqrt(d_in)
    value_w = jax.random.normal(kv, (d_in, d_out), dtype=jnp.float32) / math.sqrt(d_in)

    # Correctness sanity check with dropout disabled (p=0 -> keep-all, scale 1.0).
    out_nodrop = sfdp_attention(x1, key_w, value_w, seed=1234, dropout_p=0.0)
    out_nodrop = jax.block_until_ready(out_nodrop)
    qk_ref = jnp.matmul(x1, key_w.T) * (float(d_in) ** 0.5)
    ref = jnp.matmul(jax.nn.softmax(qk_ref, axis=-1), value_w)
    assert out_nodrop.shape == ref.shape
    assert float(jnp.max(jnp.abs(out_nodrop - ref))) < 5e-2

    # Full forward (training-mode dropout, p=0.1).
    out = sfdp_attention(x1, key_w, value_w, seed=1234, dropout_p=0.1)
    out = jax.block_until_ready(out)

    assert out.shape == (B, S, d_out)
    assert bool(jnp.all(jnp.isfinite(out)))
    print("KERNEL_OK")
</pallas_src>

<mosaic_0001>
module attributes {stable_mosaic.version = 11 : i64} {
  func.func @_attn_kernel(%arg0: memref<1xi32, #tpu.memory_space<smem>>, %arg1: memref<16x128xf32, #tpu.memory_space<vmem>>, %arg2: memref<128x128xf32, #tpu.memory_space<vmem>>, %arg3: memref<128x128xf32, #tpu.memory_space<vmem>>, %arg4: memref<16x128xf32, #tpu.memory_space<vmem>>) attributes {dimension_semantics = [], scalar_prefetch = 0 : i64, scratch_operands = 0 : i64, tpu.core_type = #tpu.core_type<tc>} {
    %c0 = arith.constant 0 : index
    %c0_0 = arith.constant 0 : index
    %0 = vector.load %arg1[%c0, %c0_0] : memref<16x128xf32, #tpu.memory_space<vmem>>, vector<16x128xf32>
    %c0_1 = arith.constant 0 : index
    %c0_2 = arith.constant 0 : index
    %1 = vector.load %arg2[%c0_1, %c0_2] : memref<128x128xf32, #tpu.memory_space<vmem>>, vector<128x128xf32>
    %c0_3 = arith.constant 0 : index
    %c0_4 = arith.constant 0 : index
    %2 = vector.load %arg3[%c0_3, %c0_4] : memref<128x128xf32, #tpu.memory_space<vmem>>, vector<128x128xf32>
    %cst = arith.constant dense<0.000000e+00> : vector<16x128xf32>
    %3 = tpu.matmul %0, %1, %cst {dimension_numbers = #tpu.dot_dimension_numbers<[1], [0], [0], [1], [0, 0, 1, 1], [], []>} : vector<16x128xf32>, vector<128x128xf32>, vector<16x128xf32> -> vector<16x128xf32>
    %cst_5 = arith.constant 5.65685415 : f32
    %4 = vector.broadcast %cst_5 : f32 to vector<16x128xf32>
    %5 = arith.mulf %3, %4 : vector<16x128xf32>
    %6 = tpu.iota {dimensions = array<i32: 1>} : vector<16x128xi32>
    %c32_i32 = arith.constant 32 : i32
    %7 = vector.broadcast %c32_i32 : i32 to vector<16x128xi32>
    %8 = arith.cmpi slt, %6, %7 : vector<16x128xi32>
    %cst_6 = arith.constant -1.000000e+30 : f32
    %9 = vector.broadcast %cst_6 : f32 to vector<16x128xf32>
    %10 = arith.select %8, %5, %9 : vector<16x128xi1>, vector<16x128xf32>
    %cst_7 = arith.constant dense<0xFF800000> : vector<16xf32>
    %11 = vector.multi_reduction <maximumf>, %10, %cst_7 [1] : vector<16x128xf32> to vector<16xf32>
    %12 = vector.shape_cast %11 : vector<16xf32> to vector<16x1xf32>
    %13 = vector.broadcast %12 : vector<16x1xf32> to vector<16x128xf32>
    %14 = arith.subf %10, %13 : vector<16x128xf32>
    %15 = math.exp %14 : vector<16x128xf32>
    %cst_8 = arith.constant 0.000000e+00 : f32
    %16 = vector.broadcast %cst_8 : f32 to vector<16x128xf32>
    %17 = arith.select %8, %15, %16 : vector<16x128xi1>, vector<16x128xf32>
    %cst_9 = arith.constant dense<0.000000e+00> : vector<16xf32>
    %18 = vector.multi_reduction <add>, %17, %cst_9 [1] : vector<16x128xf32> to vector<16xf32>
    %19 = vector.shape_cast %18 : vector<16xf32> to vector<16x1xf32>
    %20 = vector.broadcast %19 : vector<16x1xf32> to vector<16x128xf32>
    %21 = arith.divf %17, %20 : vector<16x128xf32>
    %22 = tpu.iota {dimensions = array<i32: 0>} : vector<16x128xi32>
    %c128_i32 = arith.constant 128 : i32
    %23 = vector.broadcast %c128_i32 : i32 to vector<16x128xi32>
    %24 = arith.muli %22, %23 : vector<16x128xi32>
    %25 = arith.addi %24, %6 : vector<16x128xi32>
    %c0_10 = arith.constant 0 : index
    %26 = memref.load %arg0[%c0_10] : memref<1xi32, #tpu.memory_space<smem>>
    %c-1640531527_i32 = arith.constant -1640531527 : i32
    %27 = arith.muli %26, %c-1640531527_i32 : i32
    %28 = vector.broadcast %27 : i32 to vector<16x128xi32>
    %29 = arith.xori %25, %28 : vector<16x128xi32>
    %c16_i32 = arith.constant 16 : i32
    %30 = vector.broadcast %c16_i32 : i32 to vector<16x128xi32>
    %31 = arith.shrsi %29, %30 : vector<16x128xi32>
    %c65535_i32 = arith.constant 65535 : i32
    %32 = vector.broadcast %c65535_i32 : i32 to vector<16x128xi32>
    %33 = arith.andi %31, %32 : vector<16x128xi32>
    %34 = arith.xori %29, %33 : vector<16x128xi32>
    %c-2048144789_i32 = arith.constant -2048144789 : i32
    %35 = vector.broadcast %c-2048144789_i32 : i32 to vector<16x128xi32>
    %36 = arith.muli %34, %35 : vector<16x128xi32>
    %c13_i32 = arith.constant 13 : i32
    %37 = vector.broadcast %c13_i32 : i32 to vector<16x128xi32>
    %38 = arith.shrsi %36, %37 : vector<16x128xi32>
    %c524287_i32 = arith.constant 524287 : i32
    %39 = vector.broadcast %c524287_i32 : i32 to vector<16x128xi32>
    %40 = arith.andi %38, %39 : vector<16x128xi32>
    %41 = arith.xori %36, %40 : vector<16x128xi32>
    %c-1028477387_i32 = arith.constant -1028477387 : i32
    %42 = vector.broadcast %c-1028477387_i32 : i32 to vector<16x128xi32>
    %43 = arith.muli %41, %42 : vector<16x128xi32>
    %c16_i32_11 = arith.constant 16 : i32
    %44 = vector.broadcast %c16_i32_11 : i32 to vector<16x128xi32>
    %45 = arith.shrsi %43, %44 : vector<16x128xi32>
    %c65535_i32_12 = arith.constant 65535 : i32
    %46 = vector.broadcast %c65535_i32_12 : i32 to vector<16x128xi32>
    %47 = arith.andi %45, %46 : vector<16x128xi32>
    %48 = arith.xori %43, %47 : vector<16x128xi32>
    %c16777215_i32 = arith.constant 16777215 : i32
    %49 = vector.broadcast %c16777215_i32 : i32 to vector<16x128xi32>
    %50 = arith.andi %48, %49 : vector<16x128xi32>
    %51 = arith.sitofp %50 : vector<16x128xi32> to vector<16x128xf32>
    %cst_13 = arith.constant 5.96046448E-8 : f32
    %52 = vector.broadcast %cst_13 : f32 to vector<16x128xf32>
    %53 = arith.mulf %51, %52 : vector<16x128xf32>
    %cst_14 = arith.constant 0.000000e+00 : f32
    %54 = vector.broadcast %cst_14 : f32 to vector<16x128xf32>
    %55 = arith.cmpf oge, %53, %54 : vector<16x128xf32>
    %cst_15 = arith.constant 1.000000e+00 : f32
    %56 = vector.broadcast %cst_15 : f32 to vector<16x128xf32>
    %57 = arith.mulf %21, %56 : vector<16x128xf32>
    %cst_16 = arith.constant 0.000000e+00 : f32
    %58 = vector.broadcast %cst_16 : f32 to vector<16x128xf32>
    %59 = arith.select %55, %57, %58 : vector<16x128xi1>, vector<16x128xf32>
    %cst_17 = arith.constant dense<0.000000e+00> : vector<16x128xf32>
    %60 = tpu.matmul %59, %2, %cst_17 {dimension_numbers = #tpu.dot_dimension_numbers<[1], [0], [0], [1], [0, 0, 1, 1], [], []>} : vector<16x128xf32>, vector<128x128xf32>, vector<16x128xf32> -> vector<16x128xf32>
    %c0_18 = arith.constant 0 : index
    %c0_19 = arith.constant 0 : index
    %61 = vector.load %arg4[%c0_18, %c0_19] : memref<16x128xf32, #tpu.memory_space<vmem>>, vector<16x128xf32>
    tpu.vector_store %arg4[%c0_18, %c0_19], %60 {strides = array<i32>} : memref<16x128xf32, #tpu.memory_space<vmem>>, vector<16x128xf32>,
    return
  }
}

</mosaic_0001>

<llo_original>
// kernel: tpu_custom_call.1
$region0: #{tpu_custom_call.1}
  #allocation0 [shape = 'u32[]', space=smem, size = 0x4, offset = 0x4, fixed_abs, tag = 'smem constant byte address 0x4 - core index']
  #allocation1 [shape = 'u32[72,128]{1,0:T(1,128)}', space=vmem, size = 0x9000, scoped, tag = 'internal scratch']
  #allocation2 [shape = 's32[1]{0:T(128)S(6)}', space=smem, size = 0x200, scoped, tag = 'scoped memory for tpu_custom_call.1']
  %s0 = inlined_call_operand.<no memory space> [shape: s32[1], index: 0, kind: input, shape index: {}]
  %s1 = inlined_call_operand.hbm [shape: f32[16,128], index: 1, kind: input, shape index: {}]
  %s2 = inlined_call_operand.hbm [shape: f32[128,128], index: 2, kind: input, shape index: {}]
  %s3 = inlined_call_operand.hbm [shape: f32[128,128], index: 3, kind: input, shape index: {}]
  %s4 = inlined_call_operand.hbm [shape: f32[16,128], index: 4, kind: output, shape index: {}]
  %s5 = sld [smem:[#allocation0]]
  $region38: #{tpu_custom_call.1} parent=0
    _
  %s7 = ssub.s32 1, %s5
  %s8 = scalar_select 0, %s7, %s5
  %9 = sst [smem:[#allocation2]] %s0
  $region1: #{tpu_custom_call.1} parent=0
    #allocation3 [shape = 'u8[8192]{0}', space=vmem, size = 0x2000, scoped, tag = 'input window, operand 1, single buffered']
    #allocation4 [shape = 's32[1]{0}', space=sflag, size = 0x4, scoped, tag = 'scoped memory for tpu_custom_call.1']
    #allocation5 [shape = 's32[1]{0}', space=sflag, size = 0x4, scoped, tag = 'scoped memory for tpu_custom_call.1']
    #allocation6 [shape = 'u8[65536]{0}', space=vmem, size = 0x10000, scoped, tag = 'input window, operand 2, single buffered']
    #allocation7 [shape = 's32[1]{0}', space=sflag, size = 0x4, scoped, tag = 'scoped memory for tpu_custom_call.1']
    #allocation8 [shape = 'u8[65536]{0}', space=vmem, size = 0x10000, scoped, tag = 'input window, operand 3, single buffered']
    #allocation9 [shape = 'u8[8192]{0}', space=vmem, size = 0x2000, scoped, tag = 'output window, operand 0, single buffered']
    %10 = vsyncpa [#allocation4], 0
    %11 = vsyncpa [#allocation7], 0
    %12 = vsyncpa [#allocation5], 0
    // Predicated region
    $region2: #{tpu_custom_call.1} parent=1 // pred_check
      _
    $region3: #{tpu_custom_call.1} parent=1 // pred_check_branch
      %14 = sbr.rel (0) target = $region5
    $region4: #{tpu_custom_call.1} parent=1 // pred_region
      _
    $region5: #{tpu_custom_call.1} parent=1 // pred_fallthru
      _
    // Predicated region
    $region6: #{tpu_custom_call.1} parent=1 // pred_check
      _
    $region7: #{tpu_custom_call.1} parent=1 // pred_check_branch
      %16 = sbr.rel (0) target = $region9
    $region8: #{tpu_custom_call.1} parent=1 // pred_region
      %18 = vsyncadd [#allocation4], 0
      %s19 = sshll.u32 %s1, 4
      %s20 = int_to_ptr.hbm [resolvable:$true] %s19
      %s21 = sshll.u32 [#allocation3], 4
      %s22 = int_to_ptr.vmem [resolvable:$true] %s21
      %27 = dma.hbm_to_vmem [thread:$0]  %s20, 256, %s22, [#allocation4], 128, 128, 8
    $region9: #{tpu_custom_call.1} parent=1 // pred_fallthru
      _
    // Predicated region
    $region10: #{tpu_custom_call.1} parent=1 // pred_check
      _
    $region11: #{tpu_custom_call.1} parent=1 // pred_check_branch
      %29 = sbr.rel (0) target = $region13
    $region12: #{tpu_custom_call.1} parent=1 // pred_region
      %31 = vsyncadd [#allocation7], 0
      %s32 = sshll.u32 %s2, 4
      %s33 = int_to_ptr.hbm [resolvable:$true] %s32
      %s34 = sshll.u32 [#allocation6], 4
      %s35 = int_to_ptr.vmem [resolvable:$true] %s34
      %40 = dma.hbm_to_vmem [thread:$0]  %s33, 2048, %s35, [#allocation7], 128, 128, 8
    $region13: #{tpu_custom_call.1} parent=1 // pred_fallthru
      _
    // Predicated region
    $region14: #{tpu_custom_call.1} parent=1 // pred_check
      _
    $region15: #{tpu_custom_call.1} parent=1 // pred_check_branch
      %42 = sbr.rel (0) target = $region17
    $region16: #{tpu_custom_call.1} parent=1 // pred_region
      %44 = vsyncadd [#allocation7], 0
      %s45 = sshll.u32 %s3, 4
      %s46 = int_to_ptr.hbm [resolvable:$true] %s45
      %s47 = sshll.u32 [#allocation8], 4
      %s48 = int_to_ptr.vmem [resolvable:$true] %s47
      %53 = dma.hbm_to_vmem [thread:$0]  %s46, 2048, %s48, [#allocation7], 128, 128, 8
    $region17: #{tpu_custom_call.1} parent=1 // pred_fallthru
      _
    // Predicated region
    $region18: #{tpu_custom_call.1} parent=1 // pred_check
      _
    $region19: #{tpu_custom_call.1} parent=1 // pred_check_branch
      %55 = sbr.rel (0) target = $region21
    $region20: #{tpu_custom_call.1} parent=1 // pred_region
      %57 = dma.done [#allocation4], 256
    $region21: #{tpu_custom_call.1} parent=1 // pred_fallthru
      _
    // Predicated region
    $region22: #{tpu_custom_call.1} parent=1 // pred_check
      _
    $region23: #{tpu_custom_call.1} parent=1 // pred_check_branch
      %59 = sbr.rel (0) target = $region25
    $region24: #{tpu_custom_call.1} parent=1 // pred_region
      %61 = dma.done [#allocation7], 2048
    $region25: #{tpu_custom_call.1} parent=1 // pred_fallthru
      _
    // Predicated region
    $region26: #{tpu_custom_call.1} parent=1 // pred_check
      _
    $region27: #{tpu_custom_call.1} parent=1 // pred_check_branch
      %63 = sbr.rel (0) target = $region29
    $region28: #{tpu_custom_call.1} parent=1 // pred_region
      %65 = dma.done [#allocation7], 2048
    $region29: #{tpu_custom_call.1} parent=1 // pred_fallthru
      _
    %v66 = vld [vmem:[#allocation3] sm:$0xff]
    %v67 = vld [vmem:[#allocation3 + $0x8] sm:$0xff]
    %v68 = vld [vmem:[#allocation6] sm:$0xff]
    %v69 = vld [vmem:[#allocation6 + $0x8] sm:$0xff]
    %v70 = vld [vmem:[#allocation6 + $0x10] sm:$0xff]
    %v71 = vld [vmem:[#allocation6 + $0x18] sm:$0xff]
    %v72 = vld [vmem:[#allocation6 + $0x20] sm:$0xff]
    %v73 = vld [vmem:[#allocation6 + $0x28] sm:$0xff]
    %v74 = vld [vmem:[#allocation6 + $0x30] sm:$0xff]
    %v75 = vld [vmem:[#allocation6 + $0x38] sm:$0xff]
    %v76 = vld [vmem:[#allocation6 + $0x40] sm:$0xff]
    %v77 = vld [vmem:[#allocation6 + $0x48] sm:$0xff]
    %v78 = vld [vmem:[#allocation6 + $0x50] sm:$0xff]
    %v79 = vld [vmem:[#allocation6 + $0x58] sm:$0xff]
    %v80 = vld [vmem:[#allocation6 + $0x60] sm:$0xff]
    %v81 = vld [vmem:[#allocation6 + $0x68] sm:$0xff]
    %v82 = vld [vmem:[#allocation6 + $0x70] sm:$0xff]
    %v83 = vld [vmem:[#allocation6 + $0x78] sm:$0xff]
    %v84 = vld [vmem:[#allocation8] sm:$0xff]
    %v85 = vld [vmem:[#allocation8 + $0x8] sm:$0xff]
    %v86 = vld [vmem:[#allocation8 + $0x10] sm:$0xff]
    %v87 = vld [vmem:[#allocation8 + $0x18] sm:$0xff]
    %v88 = vld [vmem:[#allocation8 + $0x20] sm:$0xff]
    %v89 = vld [vmem:[#allocation8 + $0x28] sm:$0xff]
    %v90 = vld [vmem:[#allocation8 + $0x30] sm:$0xff]
    %v91 = vld [vmem:[#allocation8 + $0x38] sm:$0xff]
    %v92 = vld [vmem:[#allocation8 + $0x40] sm:$0xff]
    %v93 = vld [vmem:[#allocation8 + $0x48] sm:$0xff]
    %v94 = vld [vmem:[#allocation8 + $0x50] sm:$0xff]
    %v95 = vld [vmem:[#allocation8 + $0x58] sm:$0xff]
    %v96 = vld [vmem:[#allocation8 + $0x60] sm:$0xff]
    %v97 = vld [vmem:[#allocation8 + $0x68] sm:$0xff]
    %v98 = vld [vmem:[#allocation8 + $0x70] sm:$0xff]
    %v99 = vld [vmem:[#allocation8 + $0x78] sm:$0xff]
    %100 = vmatpush.msra.mxu0 %v83
    %101 = vmatpush.msra.mxu0 %v82
    %102 = vmatpush.msra.mxu0 %v81
    %103 = vmatpush.msra.mxu0 %v80
    %104 = vmatpush.msra.mxu0 %v79
    %105 = vmatpush.msra.mxu0 %v78
    %106 = vmatpush.msra.mxu0 %v77
    %107 = vmatpush.msra.mxu0 %v76
    %108 = vmatpush.msra.mxu0 %v75
    %109 = vmatpush.msra.mxu0 %v74
    %110 = vmatpush.msra.mxu0 %v73
    %111 = vmatpush.msra.mxu0 %v72
    %112 = vmatpush.msra.mxu0 %v71
    %113 = vmatpush.msra.mxu0 %v70
    %114 = vmatpush.msra.mxu0 %v69
    %115 = vmatpush.msra.mxu0 %v68
    %116 = vmatmul.f32.gmra.mxu0 %v66
    %v117 = vpop.f32.mrf.mxu0
    %v118 = vadd.f32 0.0, %v117
    %119 = vmatmul.f32.gmra.mxu0 %v67
    %v120 = vpop.f32.mrf.mxu0
    %v121 = vadd.f32 0.0, %v120
    %122 = vdwg.mxu0
    %v123 = vmul.f32 %v118, 5.656854
    %v124 = vmul.f32 %v121, 5.656854
    %v125 = vlaneseq
    %v126 = vand.u32 %v125, 127
    %vm127 = vcmp.lt.s32.totalorder %v126, 32
    %v128 = vsel %vm127, %v123, -1e+30
    %v129 = vsel %vm127, %v124, -1e+30
    %130 = vmax.xlane.f32.xlu0 %v128
    %v131 = vpop.xlane.xlu0 %130
    %132 = vmax.xlane.f32.xlu0 %v129
    %v133 = vpop.xlane.xlu0 %132
    %v134 = vsub.f32 %v128, %v131
    %v135 = vsub.f32 %v129, %v133
    %v136 = vmul.f32 %v134, 1.442695
    %v137 = vpow.pop %v136
    %v138 = vmul.f32 %v135, 1.442695
    %v139 = vpow.pop %v138
    %v140 = vsel %vm127, %v137, 0.0
    %v141 = vsel %vm127, %v139, 0.0
    %142 = vadd.xlane.f32.xlu0 %v140
    %v143 = vpop.xlane.xlu0 %142
    %144 = vadd.xlane.f32.xlu0 %v141
    %v145 = vpop.xlane.xlu0 %144
    %v146 = vrcp.pop %v143
    %v147 = vmul.f32 %v143, %v146
    %v148 = vsub.f32 1.0, %v147
    %v149 = vmul.f32 %v146, %v148
    %v150 = vadd.f32 %v146, %v149
    %vm151 = vweird.f32 %v143
    %vm152 = vweird.f32 %v146
    %vm153 = vmor %vm151, %vm152
    %v154 = vsel %vm153, %v146, %v150
    %v155 = vand.u32 2147483647, %v143
    %vm156 = vcmp.eq.f32.partialorder %v155, 8.507059e+37
    %v157 = vand.u32 %v143, 2147483648
    %v158 = vor.u32 1.1754944e-38, %v157
    %v159 = vsel %vm156, %v158, %v154
    %v160 = vmul.f32 %v140, %v159
    %v161 = vrcp.pop %v145
    %v162 = vmul.f32 %v145, %v161
    %v163 = vsub.f32 1.0, %v162
    %v164 = vmul.f32 %v161, %v163
    %v165 = vadd.f32 %v161, %v164
    %vm166 = vweird.f32 %v145
    %vm167 = vweird.f32 %v161
    %vm168 = vmor %vm166, %vm167
    %v169 = vsel %vm168, %v161, %v165
    %v170 = vand.u32 2147483647, %v145
    %vm171 = vcmp.eq.f32.partialorder %v170, 8.507059e+37
    %v172 = vand.u32 %v145, 2147483648
    %v173 = vor.u32 1.1754944e-38, %v172
    %v174 = vsel %vm171, %v173, %v169
    %v175 = vmul.f32 %v141, %v174
    %v176 = vlaneseq
    %v177 = vshrl.u32 %v176, 7
    %v178 = vadd.s32 %v177, 8
    %v179 = vmul.u32 %v177, 128
    %v180 = vmul.u32 %v178, 128
    %v181 = vadd.s32 %v179, %v126
    %v182 = vadd.s32 %v180, %v126
    %s183 = sld [smem:[#allocation2]]
    %s184 = smul.u32 %s183, 2654435769
    %v185 = vstv %s184
    %v186 = vxor.u32 %v181, %v185
    %v187 = vxor.u32 %v182, %v185
    %v188 = vshra.s32 %v186, 16
    %v189 = vshra.s32 %v187, 16
    %v190 = vand.u32 %v188, 65535
    %v191 = vand.u32 %v189, 65535
    %v192 = vxor.u32 %v186, %v190
    %v193 = vxor.u32 %v187, %v191
    %v194 = vmul.u32 %v192, 2246822507
    %v195 = vmul.u32 %v193, 2246822507
    %v196 = vshra.s32 %v194, 13
    %v197 = vshra.s32 %v195, 13
    %v198 = vand.u32 %v196, 524287
    %v199 = vand.u32 %v197, 524287
    %v200 = vxor.u32 %v194, %v198
    %v201 = vxor.u32 %v195, %v199
    %v202 = vmul.u32 %v200, 3266489909
    %v203 = vmul.u32 %v201, 3266489909
    %v204 = vshra.s32 %v202, 16
    %v205 = vshra.s32 %v203, 16
    %v206 = vand.u32 %v204, 65535
    %v207 = vand.u32 %v205, 65535
    %v208 = vxor.u32 %v202, %v206
    %v209 = vxor.u32 %v203, %v207
    %v210 = vand.u32 %v208, 16777215
    %v211 = vand.u32 %v209, 16777215
    %v212 = vcvt.s32.f32 %v210
    %v213 = vcvt.s32.f32 %v211
    %v214 = vmul.f32 %v212, 5.9604645e-08
    %v215 = vmul.f32 %v213, 5.9604645e-08
    %vm216 = vcmp.ge.f32.partialorder %v214, 0.0
    %vm217 = vcmp.ge.f32.partialorder %v215, 0.0
    %v218 = vsel %vm216, %v160, 0.0
    %v219 = vsel %vm217, %v175, 0.0
    %220 = vmatpush.msra.mxu0 %v99
    %221 = vmatpush.msra.mxu0 %v98
    %222 = vmatpush.msra.mxu0 %v97
    %223 = vmatpush.msra.mxu0 %v96
    %224 = vmatpush.msra.mxu0 %v95
    %225 = vmatpush.msra.mxu0 %v94
    %226 = vmatpush.msra.mxu0 %v93
    %227 = vmatpush.msra.mxu0 %v92
    %228 = vmatpush.msra.mxu0 %v91
    %229 = vmatpush.msra.mxu0 %v90
    %230 = vmatpush.msra.mxu0 %v89
    %231 = vmatpush.msra.mxu0 %v88
    %232 = vmatpush.msra.mxu0 %v87
    %233 = vmatpush.msra.mxu0 %v86
    %234 = vmatpush.msra.mxu0 %v85
    %235 = vmatpush.msra.mxu0 %v84
    %236 = vmatmul.f32.gmra.mxu0 %v218
    %v237 = vpop.f32.mrf.mxu0
    %v238 = vadd.f32 0.0, %v237
    %239 = vmatmul.f32.gmra.mxu0 %v219
    %v240 = vpop.f32.mrf.mxu0
    %v241 = vadd.f32 0.0, %v240
    %242 = vdwg.mxu0
    %243 = vst [vmem:[#allocation9] sm:$0xff] %v238
    %244 = vst [vmem:[#allocation9 + $0x8] sm:$0xff] %v241
    // Predicated region
    $region30: #{tpu_custom_call.1} parent=1 // pred_check
      _
    $region31: #{tpu_custom_call.1} parent=1 // pred_check_branch
      %246 = sbr.rel (0) target = $region33
    $region32: #{tpu_custom_call.1} parent=1 // pred_region
      %248 = vsyncadd [#allocation5], 0
      %s249 = sshll.u32 [#allocation9], 4
      %s250 = int_to_ptr.vmem [resolvable:$true] %s249
      %s251 = sshll.u32 %s4, 4
      %s252 = int_to_ptr.hbm [resolvable:$true] %s251
      %257 = dma.vmem_to_hbm [thread:$0]  %s250, 256, %s252, [#allocation5], 128, 128, 8
    $region33: #{tpu_custom_call.1} parent=1 // pred_fallthru
      _
    // Predicated region
    $region34: #{tpu_custom_call.1} parent=1 // pred_check
      _
    $region35: #{tpu_custom_call.1} parent=1 // pred_check_branch
      %259 = sbr.rel (0) target = $region37
    $region36: #{tpu_custom_call.1} parent=1 // pred_region
      %261 = dma.done [#allocation5], 256
    $region37: #{tpu_custom_call.1} parent=1 // pred_fallthru
      _
    %262 = vsyncpa [#allocation4], 1
    %263 = vsyncpa [#allocation7], 1
    %264 = vsyncpa [#allocation5], 1

</llo_original>
